<compile_context>
chip_gen: v5e
topology: v5e:2x2
jax: 0.10.0
libtpu: 0.0.40
codegen_flags: <defaults>
</compile_context>

<pallas_src>
import math

import jax
import jax.numpy as jnp
from jax import lax
from jax.experimental import pallas as pl
from jax.experimental.pallas import tpu as pltpu


TOKEN_TILE = 256     # target tokens per grid step (production shapes)
NUM_SEGMENTS = 3     # SegmentEmbedding(segment_size=3) in the module
SEG_ROWS_PAD = 8     # pad segment table sublane dim to 8 (rows 3..7 never read)


# --------------------------------------------------------------------------
# Parameter construction (glue, plain JAX) — deterministic, no checkpoints.
# --------------------------------------------------------------------------
def make_positional_embedding(d_model: int, max_len: int = 256) -> jnp.ndarray:
    """Reproduces PositionalEmbedding.pe (shape (max_len, d_model), float32)."""
    position = jnp.arange(max_len, dtype=jnp.float32)[:, None]
    div_term = jnp.exp(
        jnp.arange(0, d_model, 2, dtype=jnp.float32)
        * (-(math.log(10000.0) / d_model))
    )
    odd_len = d_model - div_term.shape[0]
    pe = jnp.zeros((max_len, d_model), dtype=jnp.float32)
    pe = pe.at[:, 0::2].set(jnp.sin(position * div_term))
    pe = pe.at[:, 1::2].set(jnp.cos(position * div_term[:odd_len]))
    return pe


def make_embedding_table(key, num_embeddings: int, embed_size: int,
                         padding_idx: int = 0) -> jnp.ndarray:
    """nn.Embedding-style weight: N(0,1) init, padding row zeroed."""
    w = jax.random.normal(key, (num_embeddings, embed_size), dtype=jnp.float32)
    w = w.at[padding_idx].set(0.0)
    return w


def _round_up(x: int, m: int) -> int:
    return (x + m - 1) // m * m


# --------------------------------------------------------------------------
# Pallas kernel.
#
#   tok_ids_smem : (B*S_pad,)      int32  SMEM (scalar prefetch)
#   seg_ids_ref  : (TS, 1)         int32  VMEM  (per-tile segment ids)
#   pe_ref       : (TS, E)         f32    VMEM  (per-tile positional rows)
#   seg_tab_ref  : (8, E)          f32    VMEM  (full segment table, padded)
#   tok_tab_hbm  : (V, E)          f32    HBM   (raw ref, manual DMA gather)
#   out_ref      : (TS, E)         f32    VMEM
#   gather_buf   : (TS, E)         f32    VMEM scratch (gathered token rows)
#   copy_sem     : DMA semaphore
# --------------------------------------------------------------------------
def _bert_embed_kernel(tok_ids_smem, seg_ids_ref, pe_ref, seg_tab_ref,
                       tok_tab_hbm, out_ref, gather_buf, copy_sem):
    ts = out_ref.shape[0]
    vocab_rows = tok_tab_hbm.shape[0]
    b = pl.program_id(0)
    s = pl.program_id(1)
    base = (b * pl.num_programs(1) + s) * ts     # flat token offset of this tile

    # 1) Fire one row-gather DMA per token in the tile (token table stays in HBM).
    def _issue(r, carry):
        tok = tok_ids_smem[base + r]
        # Defensive clamp: nn.Embedding would raise on OOB ids; a raw DMA would
        # silently read an arbitrary row, so clamp instead.
        tok = jnp.clip(tok, 0, vocab_rows - 1)
        pltpu.make_async_copy(
            tok_tab_hbm.at[pl.ds(tok, 1), :],
            gather_buf.at[pl.ds(r, 1), :],
            copy_sem,
        ).start()
        return carry

    lax.fori_loop(0, ts, _issue, 0)

    # 2) While the gather DMAs are in flight: positional slice + segment select
    #    (pure VPU work; segment ids are only {0, 1, 2}).
    seg_ids = seg_ids_ref[...]                      # (TS, 1) int32
    row0 = seg_tab_ref[0:1, :]
    row1 = seg_tab_ref[1:2, :]
    row2 = seg_tab_ref[2:3, :]
    seg_emb = jnp.where(seg_ids == 0, row0,
                        jnp.where(seg_ids == 1, row1, row2))   # (TS, E)
    pos_plus_seg = pe_ref[...] + seg_emb

    # 3) Drain the gather DMAs (per-row waits; all transfers are identically
    #    sized, so the semaphore is fully drained regardless of count units).
    def _drain(r, carry):
        pltpu.make_async_copy(
            tok_tab_hbm.at[pl.ds(0, 1), :],
            gather_buf.at[pl.ds(r, 1), :],
            copy_sem,
        ).wait()
        return carry

    lax.fori_loop(0, ts, _drain, 0)

    out_ref[...] = gather_buf[...] + pos_plus_seg


# --------------------------------------------------------------------------
# Wrapper.
# --------------------------------------------------------------------------
@jax.jit
def bert_embedding_forward(sequence, segment_label,
                           token_table, pe_table, segment_table):
    """Pallas implementation of BERTEmbedding.forward (dropout in eval mode)."""
    B, S = sequence.shape
    V, E = token_table.shape

    # Tokens-per-tile: 256 for real shapes, shrink (multiple of 8) for tiny S.
    ts = min(TOKEN_TILE, _round_up(S, 8))
    s_pad = _round_up(S, ts)
    num_s_tiles = s_pad // ts
    n_tok_pad = B * s_pad

    # --- tables -----------------------------------------------------------
    tok_tab = token_table.astype(jnp.float32)          # stays in HBM (pl.ANY)

    pe_f32 = pe_table.astype(jnp.float32)
    if s_pad <= pe_f32.shape[0]:
        pe_pad = pe_f32[:s_pad]
    else:  # padded positions beyond max_len are never kept in the output
        pe_pad = jnp.pad(pe_f32, ((0, s_pad - pe_f32.shape[0]), (0, 0)))

    seg_rows = segment_table.shape[0]
    seg_tab = jnp.pad(segment_table.astype(jnp.float32),
                      ((0, SEG_ROWS_PAD - seg_rows), (0, 0)))

    # --- ids ---------------------------------------------------------------
    # Pad positions S..s_pad-1 get token id 0 / segment id 0 (both zero rows);
    # they are sliced off below, so the PE value there is irrelevant.
    tok_ids = jnp.pad(sequence.astype(jnp.int32),
                      ((0, 0), (0, s_pad - S))).reshape(-1)          # (B*s_pad,)
    seg_ids = jnp.pad(segment_label.astype(jnp.int32),
                      ((0, 0), (0, s_pad - S))).reshape(n_tok_pad, 1)

    out_flat = pl.pallas_call(
        _bert_embed_kernel,
        out_shape=jax.ShapeDtypeStruct((n_tok_pad, E), jnp.float32),
        grid_spec=pltpu.PrefetchScalarGridSpec(
            num_scalar_prefetch=1,                     # flat token ids -> SMEM
            grid=(B, num_s_tiles),
            in_specs=[
                # per-tile segment ids (lane dim == full array dim 1)
                pl.BlockSpec((ts, 1),
                             lambda b, s, tok: (b * num_s_tiles + s, 0)),
                # positional rows for this sequence tile: pure BlockSpec slice
                pl.BlockSpec((ts, E), lambda b, s, tok: (s, 0)),
                # tiny segment table, constant block -> VMEM resident
                pl.BlockSpec((SEG_ROWS_PAD, E), lambda b, s, tok: (0, 0)),
                # token table: raw HBM ref, rows gathered by manual DMA
                pl.BlockSpec(memory_space=pl.ANY),
            ],
            out_specs=pl.BlockSpec((ts, E),
                                   lambda b, s, tok: (b * num_s_tiles + s, 0)),
            scratch_shapes=[
                pltpu.VMEM((ts, E), jnp.float32),      # gathered token rows
                pltpu.SemaphoreType.DMA(()),           # row-gather semaphore
            ],
        ),
        compiler_params=pltpu.CompilerParams(
            # Both axes are embarrassingly parallel (no cross-tile state).
            dimension_semantics=("parallel", "parallel"),
        ),
    )(tok_ids, seg_ids, pe_pad, seg_tab, tok_tab)

    out = out_flat.reshape(B, s_pad, E)[:, :S, :]
    # TODO(synk): nn.Dropout(p=0.1) is modeled in eval mode (identity).
    return out


# --------------------------------------------------------------------------
# Pure-JAX reference for a correctness check.
# --------------------------------------------------------------------------
def bert_embedding_ref(sequence, segment_label,
                       token_table, pe_table, segment_table):
    tok = token_table[sequence]                         # (B, S, E)
    pos = pe_table[: sequence.shape[1]][None, :, :]     # (1, S, E)
    seg = segment_table[segment_label]                  # (B, S, E)
    return tok + pos + seg


if __name__ == "__main__":
    # Small, BERT-embedding-consistent shapes.
    B, S = 2, 8
    VOCAB = 64
    EMBED = 128        # lane-aligned embed size
    SEGMENTS = NUM_SEGMENTS
    MAX_LEN = 256

    key = jax.random.PRNGKey(0)
    k_tok, k_seg, k_ids, k_segids = jax.random.split(key, 4)

    token_table = make_embedding_table(k_tok, VOCAB, EMBED, padding_idx=0)
    segment_table = make_embedding_table(k_seg, SEGMENTS, EMBED, padding_idx=0)
    pe_table = make_positional_embedding(EMBED, MAX_LEN)

    sequence = jax.random.randint(k_ids, (B, S), 0, VOCAB, dtype=jnp.int32)
    segment_label = jax.random.randint(k_segids, (B, S), 0, SEGMENTS,
                                       dtype=jnp.int32)

    out = bert_embedding_forward(sequence, segment_label,
                                 token_table, pe_table, segment_table)
    out = jax.block_until_ready(out)

    ref = bert_embedding_ref(sequence, segment_label,
                             token_table, pe_table, segment_table)
    assert out.shape == (B, S, EMBED), out.shape
    assert jnp.allclose(out, ref, atol=1e-4, rtol=1e-4), "mismatch vs reference"

    print("KERNEL_OK")
</pallas_src>

<mosaic_0001>
module attributes {stable_mosaic.version = 11 : i64} {
  func.func @_bert_embed_kernel(%arg0: i32, %arg1: i32, %arg2: memref<16xi32, #tpu.memory_space<smem>>, %arg3: memref<8x1xi32, #tpu.memory_space<vmem>>, %arg4: memref<8x128xf32, #tpu.memory_space<vmem>>, %arg5: memref<8x128xf32, #tpu.memory_space<vmem>>, %arg6: memref<64x128xf32, #tpu.memory_space<any>>, %arg7: memref<8x128xf32, #tpu.memory_space<vmem>>, %arg8: memref<8x128xf32, #tpu.memory_space<vmem>>, %arg9: memref<!tpu.dma_semaphore, #tpu.memory_space<semaphore_mem>>) attributes {dimension_semantics = [#tpu.dimension_semantics<parallel>, #tpu.dimension_semantics<parallel>], iteration_bounds = array<i64: 2, 1>, scalar_prefetch = 1 : i64, scratch_operands = 2 : i64, tpu.core_type = #tpu.core_type<tc>, window_params = [{transform_indices = @transform_0, window_bounds = array<i64: 8, 1>}, {transform_indices = @transform_1, window_bounds = array<i64: 8, 128>}, {pipeline_mode = #tpu.pipeline_mode<synchronous>, transform_indices = @transform_2, window_bounds = array<i64: 8, 128>}, {}, {transform_indices = @transform_4, window_bounds = array<i64: 8, 128>}]} {
    %c1_i32 = arith.constant 1 : i32
    %0 = arith.muli %arg0, %c1_i32 : i32
    %1 = arith.addi %0, %arg1 : i32
    %c8_i32 = arith.constant 8 : i32
    %2 = arith.muli %1, %c8_i32 : i32
    %c0_i32 = arith.constant 0 : i32
    %c8_i32_0 = arith.constant 8 : i32
    %3 = arith.addi %c0_i32, %c8_i32_0 : i32
    %c1_i32_1 = arith.constant 1 : i32
    scf.for %arg10 = %c0_i32 to %3 step %c1_i32_1  : i32 {
      %30 = arith.addi %2, %arg10 : i32
      %31 = arith.index_cast %30 : i32 to index
      %32 = memref.load %arg2[%31] : memref<16xi32, #tpu.memory_space<smem>>
      %c0_i32_20 = arith.constant 0 : i32
      %c63_i32 = arith.constant 63 : i32
      %33 = arith.maxsi %c0_i32_20, %32 : i32
      %34 = arith.minsi %c63_i32, %33 : i32
      %c0_i32_21 = arith.constant 0 : i32
      %35 = tpu.memref_slice %arg6[%34, %c0_i32_21] : memref<64x128xf32, #tpu.memory_space<any>> -> memref<1x128xf32, #tpu.memory_space<any>>
      %c0_i32_22 = arith.constant 0 : i32
      %36 = tpu.memref_slice %arg8[%arg10, %c0_i32_22] : memref<8x128xf32, #tpu.memory_space<vmem>> -> memref<1x128xf32, #tpu.memory_space<vmem>>
      tpu.enqueue_dma source(%35 : memref<1x128xf32, #tpu.memory_space<any>>) target(%36 : memref<1x128xf32, #tpu.memory_space<vmem>>) target_semaphore(%arg9 : memref<!tpu.dma_semaphore, #tpu.memory_space<semaphore_mem>>)
    }
    %c8_i32_2 = arith.constant 8 : i32
    %c0 = arith.constant 0 : index
    %c0_3 = arith.constant 0 : index
    %4 = vector.load %arg3[%c0, %c0_3] : memref<8x1xi32, #tpu.memory_space<vmem>>, vector<8x1xi32>
    %c0_4 = arith.constant 0 : index
    %c0_5 = arith.constant 0 : index
    %5 = vector.load %arg5[%c0_4, %c0_5] : memref<8x128xf32, #tpu.memory_space<vmem>>, vector<1x128xf32>
    %c1 = arith.constant 1 : index
    %c0_6 = arith.constant 0 : index
    %6 = vector.load %arg5[%c1, %c0_6] : memref<8x128xf32, #tpu.memory_space<vmem>>, vector<1x128xf32>
    %c2 = arith.constant 2 : index
    %c0_7 = arith.constant 0 : index
    %7 = vector.load %arg5[%c2, %c0_7] : memref<8x128xf32, #tpu.memory_space<vmem>>, vector<1x128xf32>
    %c0_i32_8 = arith.constant 0 : i32
    %8 = vector.broadcast %c0_i32_8 : i32 to vector<8x1xi32>
    %9 = arith.cmpi eq, %4, %8 : vector<8x1xi32>
    %c1_i32_9 = arith.constant 1 : i32
    %10 = vector.broadcast %c1_i32_9 : i32 to vector<8x1xi32>
    %11 = arith.cmpi eq, %4, %10 : vector<8x1xi32>
    %12 = vector.shape_cast %11 : vector<8x1xi1> to vector<8x1xi1>
    %13 = vector.broadcast %12 : vector<8x1xi1> to vector<8x128xi1>
    %14 = vector.shape_cast %6 : vector<1x128xf32> to vector<1x128xf32>
    %15 = vector.broadcast %14 : vector<1x128xf32> to vector<8x128xf32>
    %16 = vector.shape_cast %7 : vector<1x128xf32> to vector<1x128xf32>
    %17 = vector.broadcast %16 : vector<1x128xf32> to vector<8x128xf32>
    %18 = arith.select %13, %15, %17 : vector<8x128xi1>, vector<8x128xf32>
    %19 = vector.shape_cast %9 : vector<8x1xi1> to vector<8x1xi1>
    %20 = vector.broadcast %19 : vector<8x1xi1> to vector<8x128xi1>
    %21 = vector.shape_cast %5 : vector<1x128xf32> to vector<1x128xf32>
    %22 = vector.broadcast %21 : vector<1x128xf32> to vector<8x128xf32>
    %23 = arith.select %20, %22, %18 : vector<8x128xi1>, vector<8x128xf32>
    %c0_10 = arith.constant 0 : index
    %c0_11 = arith.constant 0 : index
    %24 = vector.load %arg4[%c0_10, %c0_11] : memref<8x128xf32, #tpu.memory_space<vmem>>, vector<8x128xf32>
    %25 = arith.addf %24, %23 : vector<8x128xf32>
    %c0_i32_12 = arith.constant 0 : i32
    %c8_i32_13 = arith.constant 8 : i32
    %26 = arith.addi %c0_i32_12, %c8_i32_13 : i32
    %c1_i32_14 = arith.constant 1 : i32
    scf.for %arg10 = %c0_i32_12 to %26 step %c1_i32_14  : i32 {
      %c0_i32_20 = arith.constant 0 : i32
      %c0_i32_21 = arith.constant 0 : i32
      %30 = tpu.memref_slice %arg6[%c0_i32_20, %c0_i32_21] : memref<64x128xf32, #tpu.memory_space<any>> -> memref<1x128xf32, #tpu.memory_space<any>>
      %c0_i32_22 = arith.constant 0 : i32
      %31 = tpu.memref_slice %arg8[%arg10, %c0_i32_22] : memref<8x128xf32, #tpu.memory_space<vmem>> -> memref<1x128xf32, #tpu.memory_space<vmem>>
      tpu.wait_dma2 semaphore(%arg9 : memref<!tpu.dma_semaphore, #tpu.memory_space<semaphore_mem>>) src(%30 : memref<1x128xf32, #tpu.memory_space<any>>) dst(%31 : memref<1x128xf32, #tpu.memory_space<vmem>>)
    }
    %c8_i32_15 = arith.constant 8 : i32
    %c0_16 = arith.constant 0 : index
    %c0_17 = arith.constant 0 : index
    %27 = vector.load %arg8[%c0_16, %c0_17] : memref<8x128xf32, #tpu.memory_space<vmem>>, vector<8x128xf32>
    %28 = arith.addf %27, %25 : vector<8x128xf32>
    %c0_18 = arith.constant 0 : index
    %c0_19 = arith.constant 0 : index
    %29 = vector.load %arg7[%c0_18, %c0_19] : memref<8x128xf32, #tpu.memory_space<vmem>>, vector<8x128xf32>
    tpu.vector_store %arg7[%c0_18, %c0_19], %28 {strides = array<i32>} : memref<8x128xf32, #tpu.memory_space<vmem>>, vector<8x128xf32>,
    return
  }
  func.func @transform_0(%arg0: i32, %arg1: i32, %arg2: memref<16xi32, #tpu.memory_space<smem>>) -> (i32, i32) {
    %c1_i32 = arith.constant 1 : i32
    %0 = arith.muli %arg0, %c1_i32 : i32
    %1 = arith.addi %0, %arg1 : i32
    %c0_i32 = arith.constant 0 : i32
    %c0_i32_0 = arith.constant 0 : i32
    return %1, %c0_i32 : i32, i32
  }
  func.func @transform_1(%arg0: i32, %arg1: i32, %arg2: memref<16xi32, #tpu.memory_space<smem>>) -> (i32, i32) {
    %c0_i32 = arith.constant 0 : i32
    %c0_i32_0 = arith.constant 0 : i32
    return %arg1, %c0_i32 : i32, i32
  }
  func.func @transform_2(%arg0: i32, %arg1: i32, %arg2: memref<16xi32, #tpu.memory_space<smem>>) -> (i32, i32) {
    %c0_i32 = arith.constant 0 : i32
    %c0_i32_0 = arith.constant 0 : i32
    %c0_i32_1 = arith.constant 0 : i32
    return %c0_i32, %c0_i32_0 : i32, i32
  }
  func.func @transform_4(%arg0: i32, %arg1: i32, %arg2: memref<16xi32, #tpu.memory_space<smem>>) -> (i32, i32) {
    %c1_i32 = arith.constant 1 : i32
    %0 = arith.muli %arg0, %c1_i32 : i32
    %1 = arith.addi %0, %arg1 : i32
    %c0_i32 = arith.constant 0 : i32
    %c0_i32_0 = arith.constant 0 : i32
    return %1, %c0_i32 : i32, i32
  }
}

</mosaic_0001>

<llo_original>
// kernel: bert_embedding_forward.1
$region0: #{bert_embedding_forward.1}
  #allocation0 [shape = 'u32[]', space=smem, size = 0x4, offset = 0x4, fixed_abs, tag = 'smem constant byte address 0x4 - core index']
  #allocation1 [shape = 'u32[72,128]{1,0:T(1,128)}', space=vmem, size = 0x9000, scoped, tag = 'internal scratch']
  #allocation2 [shape = 'f32[8,128]{1,0:T(8,128)}', space=vmem, size = 0x1000, scoped, tag = 'scratch operand']
  #allocation3 [shape = 's32[1]{0}', space=sflag, size = 0x4, scoped, tag = 'scratch operand']
  #allocation4 [shape = 's32[1]{0}', space=sflag, size = 0x4, scoped, tag = 'scoped memory for bert_embedding_forward.1']
  #allocation5 [shape = 'u8[512]{0}', space=smem, size = 0x200, scoped, tag = 'prefetched SMEM operand 0']
  #allocation8 [shape = 's32[]', space=sflag, size = 0x4, offset = 0, fixed_abs, tag = 'sflag constant byte address 0x0 - dummy sync flag']
  #allocation9 [shape = 's32[]', space=sflag, size = 0x4, offset = 0, fixed_abs, tag = 'sflag constant byte address 0x0 - dummy sync flag']
  #allocation10 [shape = 'u32[]', space=smem, size = 0x4, offset = 0x44, fixed_abs, tag = 'smem constant byte address 0x44 - assertion arg 0']
  #allocation11 [shape = 'u32[]', space=smem, size = 0x4, offset = 0x48, fixed_abs, tag = 'smem constant byte address 0x48 - assertion arg 1']
  %s0 = inlined_call_operand.vmem [shape: s32[16], index: 0, kind: input, shape index: {}]
  %s1 = inlined_call_operand.vmem [shape: s32[16,1], index: 1, kind: input, shape index: {}]
  %s2 = inlined_call_operand.vmem [shape: f32[8,128], index: 2, kind: input, shape index: {}]
  %s3 = inlined_call_operand.vmem [shape: f32[8,128], index: 3, kind: input, shape index: {}]
  %s4 = inlined_call_operand.hbm [shape: f32[64,128], index: 4, kind: input, shape index: {}]
  %s5 = inlined_call_operand.hbm [shape: f32[16,128], index: 5, kind: output, shape index: {}]
  %s6 = sld [smem:[#allocation0]]
  $region63: #{bert_embedding_forward.1} parent=0
    _
  %s8 = ssub.s32 1, %s6
  %s9 = scalar_select 0, %s8, %s6
  %s11 = sshll.u32 %s0, 4
  %s12 = int_to_ptr.vmem [resolvable:$true] %s11
  %14 = dma.vmem_to_smem %s12, 16, [#allocation5], [#allocation4]
  %16 = dma.done [#allocation4], 16
  %17 = sfence
  $region1: #{bert_embedding_forward.1} parent=0
    #allocation6 [shape = 'u8[8192]{0}', space=vmem, size = 0x2000, scoped, tag = 'output window, operand 0']
    #allocation7 [shape = 's32[2]{0}', space=sflag, size = 0x8, scoped, tag = 'scoped memory for bert_embedding_forward.1']
    %18 = vsyncpa [#allocation7], 0
    %s19 = scalar_lea.sflag [#allocation7], 1
    %20 = vsyncpa %s19, 0
    loop: start=0, step=1, limit=4
    $region2: #{bert_embedding_forward.1} parent=1 // loop_pre_header
      _
    $region3: #{bert_embedding_forward.1} parent=1 // loop_header
      %s22 = sphi 0, %s26
      %p23 = scmp.ge.s32.totalorder %s22, 4
      %s29 = sphi 0, %s41
      %s30 = sphi 0, %s37
      %s31 = sphi 0, %s29
      %s32 = sphi 0, %s30
      %s33 = sphi 0, %s31
      %s34 = sphi 0, %s32
      %s46 = sphi 0, %s48
      %s49 = sphi 0, %s46
      %s50 = sphi 0, %s49
      %s66 = sphi 0, %s50
      %s72 = sphi 0, %s74
      %s75 = sphi 0, %s72
      %s76 = sphi 0, %s75
      %s92 = sphi 0, %s76
      %s96 = sphi 0, %s96
      %s98 = sphi 0, %s96
      %s99 = sphi 0, %s98
      %s113 = sphi 0, %s99
      %s121 = sphi 0, %s123
      %s124 = sphi 0, %s121
      %s125 = sphi 0, %s124
      %s141 = sphi 0, %s125
    $region4: #{bert_embedding_forward.1} parent=1 // loop_header_branch
      %25 = sbr.rel (%p23) target = $region8
    $region5: #{bert_embedding_forward.1} parent=1 // loop_body
      %s27 = ssub.s32 %s22, 1
      %s28 = ssub.s32 %s22, 2
      %s35 = sadd.s32 1, %s30
      %p36 = scmp.ge.s32.totalorder %s35, 1
      %s37 = scalar_select %p36, 0, %s35
      %s38 = sadd.s32 1, %s29
      %s39 = scalar_select %p36, %s38, %s29
      %p40 = scmp.ge.s32.totalorder %s39, 2
      %s41 = scalar_select %p40, 0, %s39
      %s42 = sadd.s32 %s29, %s30
      %s43 = sadd.s32 %s41, %s37
      %s44 = ssub.s32 %s42, %s43
      %p45 = scmp.eq.s32.totalorder %s44, 0
      %s47 = sadd.s32 %s46, 1
      %s48 = scalar_select %p45, %s46, %s47
      %p51 = pneg %p45
      %p52 = scmp.eq.s32.totalorder %s22, 1
      %p53 = por %p51, %p52
      %p54 = scmp.ne.s32.totalorder %s46, %s49
      %p55 = scmp.eq.s32.totalorder %s22, 0
      %p56 = por %p54, %p55
      %p57 = scmp.ne.s32.totalorder %s46, %s49
      %p58 = scmp.eq.s32.totalorder %s27, 1
      %p59 = por %p57, %p58
      %p60 = scmp.ne.s32.totalorder %s49, %s50
      %p61 = scmp.eq.s32.totalorder %s27, 0
      %p62 = por %p60, %p61
      %p63 = scmp.ne.s32.totalorder %s49, %s50
      %p64 = scmp.eq.s32.totalorder %s28, 1
      %p65 = por %p63, %p64
      %p67 = scmp.ne.s32.totalorder %s50, %s66
      %p68 = scmp.eq.s32.totalorder %s28, 0
      %p69 = por %p67, %p68
      %s70 = ssub.s32 %s30, %s37
      %p71 = scmp.eq.s32.totalorder %s70, 0
      %s73 = sadd.s32 %s72, 1
      %s74 = scalar_select %p71, %s72, %s73
      %p77 = pneg %p71
      %p78 = scmp.eq.s32.totalorder %s22, 1
      %p79 = por %p77, %p78
      %p80 = scmp.ne.s32.totalorder %s72, %s75
      %p81 = scmp.eq.s32.totalorder %s22, 0
      %p82 = por %p80, %p81
      %p83 = scmp.ne.s32.totalorder %s72, %s75
      %p84 = scmp.eq.s32.totalorder %s27, 1
      %p85 = por %p83, %p84
      %p86 = scmp.ne.s32.totalorder %s75, %s76
      %p87 = scmp.eq.s32.totalorder %s27, 0
      %p88 = por %p86, %p87
      %p89 = scmp.ne.s32.totalorder %s75, %s76
      %p90 = scmp.eq.s32.totalorder %s28, 1
      %p91 = por %p89, %p90
      %p93 = scmp.ne.s32.totalorder %s76, %s92
      %p94 = scmp.eq.s32.totalorder %s28, 0
      %p95 = por %p93, %p94
      %s97 = sadd.s32 %s96, 1
      %p100 = scmp.eq.s32.totalorder %s22, 1
      %p101 = scmp.ne.s32.totalorder %s96, %s98
      %p102 = scmp.eq.s32.totalorder %s22, 0
      %p103 = por %p101, %p102
      %p104 = scmp.ne.s32.totalorder %s96, %s98
      %p105 = scmp.eq.s32.totalorder %s27, 1
      %p106 = por %p104, %p105
      %p107 = scmp.ne.s32.totalorder %s98, %s99
      %p108 = scmp.eq.s32.totalorder %s27, 0
      %p109 = por %p107, %p108
      %p110 = scmp.ne.s32.totalorder %s98, %s99
      %p111 = scmp.eq.s32.totalorder %s28, 1
      %p112 = por %p110, %p111
      %p114 = scmp.ne.s32.totalorder %s99, %s113
      %p115 = scmp.eq.s32.totalorder %s28, 0
      %p116 = por %p114, %p115
      %s117 = sadd.s32 %s29, %s30
      %s118 = sadd.s32 %s41, %s37
      %s119 = ssub.s32 %s117, %s118
      %p120 = scmp.eq.s32.totalorder %s119, 0
      %s122 = sadd.s32 %s121, 1
      %s123 = scalar_select %p120, %s121, %s122
      %p126 = pneg %p120
      %p127 = scmp.eq.s32.totalorder %s22, 1
      %p128 = por %p126, %p127
      %p129 = scmp.ne.s32.totalorder %s121, %s124
      %p130 = scmp.eq.s32.totalorder %s22, 0
      %p131 = por %p129, %p130
      %p132 = scmp.ne.s32.totalorder %s121, %s124
      %p133 = scmp.eq.s32.totalorder %s27, 1
      %p134 = por %p132, %p133
      %p135 = scmp.ne.s32.totalorder %s124, %s125
      %p136 = scmp.eq.s32.totalorder %s27, 0
      %p137 = por %p135, %p136
      %p138 = scmp.ne.s32.totalorder %s124, %s125
      %p139 = scmp.eq.s32.totalorder %s28, 1
      %p140 = por %p138, %p139
      %p142 = scmp.ne.s32.totalorder %s125, %s141
      %p143 = scmp.eq.s32.totalorder %s28, 0
      %p144 = por %p142, %p143
      %p145 = scmp.le.s32.totalorder 1, %s22
      %p146 = scmp.lt.s32.totalorder %s22, 3
      %p147 = pnand %p145, %p146
      %p148 = pneg %p147
      // Predicated region
      $region9: #{bert_embedding_forward.1} parent=5 // pred_check
        _
      $region10: #{bert_embedding_forward.1} parent=5 // pred_check_branch
        %150 = sbr.rel (%p147) target = $region12
      $region11: #{bert_embedding_forward.1} parent=5 // pred_region
        %s151 = ssub.s32 %s22, 1
        // Predicated region
        $region13: #{bert_embedding_forward.1} parent=11 // pred_check
          %p152 = pneg %p88
        $region14: #{bert_embedding_forward.1} parent=11 // pred_check_branch
          %154 = sbr.rel (%p152) target = $region16
        $region15: #{bert_embedding_forward.1} parent=11 // pred_region
          %p155 = scmp.lt.s32.totalorder %s32, 0
          %s156 = scalar_select %p155, %s32, 0
          %s157 = smul.addr %s156, 8
          %s158 = scalar_lea.vmem %s2, %s157
        $region16: #{bert_embedding_forward.1} parent=11 // pred_fallthru
          _
        // Predicated region
        $region17: #{bert_embedding_forward.1} parent=11 // pred_check
          %p159 = pneg %p109
        $region18: #{bert_embedding_forward.1} parent=11 // pred_check_branch
          %161 = sbr.rel (%p159) target = $region20
        $region19: #{bert_embedding_forward.1} parent=11 // pred_region
          _
        $region20: #{bert_embedding_forward.1} parent=11 // pred_fallthru
          _
      $region12: #{bert_embedding_forward.1} parent=5 // pred_fallthru
        _
      %p162 = scmp.lt.s32.totalorder %s22, 2
      // Predicated region
      $region21: #{bert_embedding_forward.1} parent=5 // pred_check
        %p163 = pneg %p162
      $region22: #{bert_embedding_forward.1} parent=5 // pred_check_branch
        %165 = sbr.rel (%p163) target = $region24
      $region23: #{bert_embedding_forward.1} parent=5 // pred_region
        // Predicated region
        $region25: #{bert_embedding_forward.1} parent=23 // pred_check
          %p166 = pneg %p56
        $region26: #{bert_embedding_forward.1} parent=23 // pred_check_branch
          %168 = sbr.rel (%p166) target = $region28
        $region27: #{bert_embedding_forward.1} parent=23 // pred_region
          %s169 = sadd.s32 %s29, %s30
          %p170 = scmp.lt.s32.totalorder %s169, 1
          %s171 = scalar_select %p170, %s169, 1
          %s172 = smul.addr %s171, 8
          %s173 = scalar_lea.vmem %s1, %s172
          %s174 = sadd.s32 %s29, %s30
        $region28: #{bert_embedding_forward.1} parent=23 // pred_fallthru
          _
      $region24: #{bert_embedding_forward.1} parent=5 // pred_fallthru
        _
      %p175 = scmp.le.s32.totalorder 1, %s22
      %p176 = scmp.lt.s32.totalorder %s22, 3
      %p177 = pnand %p175, %p176
      %p178 = pneg %p177
      // Predicated region
      $region29: #{bert_embedding_forward.1} parent=5 // pred_check
        _
      $region30: #{bert_embedding_forward.1} parent=5 // pred_check_branch
        %180 = sbr.rel (%p177) target = $region32
      $region31: #{bert_embedding_forward.1} parent=5 // pred_region
        %s181 = ssub.s32 %s22, 1
        %s182 = sadd.s32 %s31, %s32
        %p183 = scmp.lt.s32.totalorder %s182, 1
        %s184 = scalar_select %p183, %s182, 1
        %s185 = smul.addr %s184, 8
        %s186 = scalar_lea.vmem %s1, %s185
        %p187 = pneg %p62
        %p188 = pneg %p59
        %p189 = scmp.lt.s32.totalorder %s32, 0
        %s190 = scalar_select %p189, %s32, 0
        %s191 = smul.addr %s190, 8
        %s192 = scalar_lea.vmem %s2, %s191
        %p193 = pneg %p88
        %p194 = pneg %p85
        %p195 = pneg %p109
        %p196 = pneg %p106
        %p197 = pneg %p137
        %p198 = pneg %p134
        %s199 = sand.u32 %s124, 1
        %s200 = scalar_lea.sflag [#allocation7], %s199
        %s201 = sand.u32 %s124, 1
        %s202 = smul.addr %s201, 8
        %s203 = scalar_lea.vmem [#allocation6], %s202
        %s204 = sadd.s32 %s31, %s32
        %p205 = scmp.lt.s32.totalorder %s204, 1
        %s206 = scalar_select %p205, %s204, 1
        %s207 = smul.addr %s206, 8
        %s208 = scalar_lea.vmem %s1, %s207
        %s209 = sadd.s32 %s31, %s32
        %p210 = scmp.lt.s32.totalorder %s32, 0
        %s211 = scalar_select %p210, %s32, 0
        %s212 = smul.addr %s211, 8
        %s213 = scalar_lea.vmem %s2, %s212
        %s214 = sadd.s32 %s31, %s32
        %s215 = sadd.s32 %s31, %s32
        %s216 = smul.u32 %s215, 8
        loop: start=0, step=1, limit=8
        $region33: #{bert_embedding_forward.1} parent=31 // loop_pre_header
          _
        $region34: #{bert_embedding_forward.1} parent=31 // loop_header
          %s218 = sphi 0, %s222
          %p219 = scmp.ge.s32.totalorder %s218, 8
        $region35: #{bert_embedding_forward.1} parent=31 // loop_header_branch
          %221 = sbr.rel (%p219) target = $region39
        $region36: #{bert_embedding_forward.1} parent=31 // loop_body
          %s223 = sadd.s32 %s216, %s218
          %s224 = sld [smem:[#allocation5 + %s223]]
          %p225 = scmp.gt.s32.totalorder %s224, 0
          %s226 = scalar_select %p225, %s224, 0
          %p227 = scmp.lt.s32.totalorder %s226, 63
          %s228 = scalar_select %p227, %s226, 63
          %s229 = scalar_lea.hbm %s4, %s228
          %s230 = scalar_lea.vmem [#allocation2], %s218
          // Predicated region
          $region40: #{bert_embedding_forward.1} parent=36 // pred_check
            _
          $region41: #{bert_embedding_forward.1} parent=36 // pred_check_branch
            %232 = sbr.rel target = $region43
          $region42: #{bert_embedding_forward.1} parent=36 // pred_region
            %233 = sst [smem:[#allocation10]] [#allocation9]
            %234 = sst [smem:[#allocation11]] [#allocation8]
          $region43: #{bert_embedding_forward.1} parent=36 // pred_fallthru
            _
          %236 = shalt.err (0)
          %s238 = sshll.u32 %s229, 4
          %s239 = int_to_ptr.hbm [resolvable:$true] %s238
          %s240 = sshll.u32 %s230, 4
          %s241 = int_to_ptr.vmem [resolvable:$true] %s240
          %243 = dma.hbm_to_vmem [thread:$0]  %s239, 16, %s241, [#allocation3]
        $region37: #{bert_embedding_forward.1} parent=31 // loop_footer
          %s222 = sadd.s32 1, %s218
        $region38: #{bert_embedding_forward.1} parent=31 // loop_footer_branch
          %217 = sbr.rel target = $region34
        $region39: #{bert_embedding_forward.1} parent=31 // loop_exit
          _
        %v244 = vld [vmem:[%s208] sm:$0xff]
        %v245 = vld [vmem:[%s3] sm:$0x1]
        %v246 = vld [vmem:[%s3 + $0x1] sm:$0x1]
        %v247 = vld [vmem:[%s3 + $0x2] sm:$0x1]
        %vm248 = vcmp.eq.s32.totalorder %v244, 0
        %vm249 = vcmp.eq.s32.totalorder %v244, 1
        %v250 = vsel %vm249, 1, 0
        %251 = vset.pattern.permute.xlu0 0
        %252 = vperm.xlu0 %251, %v250
        %v253 = vpop.permute.xlu0 %252
        %vm254 = vcmp.eq.s32.totalorder %v253, 1
        %v255 = vperm.slane %v246, 0
        %v256 = vperm.slane %v247, 0
        %v257 = vsel %vm254, %v255, %v256
        %v258 = vsel %vm248, 1, 0
        %259 = vset.pattern.permute.xlu0 0
        %260 = vperm.xlu0 %259, %v258
        %v261 = vpop.permute.xlu0 %260
        %vm262 = vcmp.eq.s32.totalorder %v261, 1
        %v263 = vperm.slane %v245, 0
        %v264 = vsel %vm262, %v263, %v257
        %v265 = vld [vmem:[%s213] sm:$0xff]
        %v266 = vadd.f32 %v265, %v264
        loop: start=0, step=1, limit=8
        $region44: #{bert_embedding_forward.1} parent=31 // loop_pre_header
          _
        $region45: #{bert_embedding_forward.1} parent=31 // loop_header
          %s268 = sphi 0, %s272
          %p269 = scmp.ge.s32.totalorder %s268, 8
        $region46: #{bert_embedding_forward.1} parent=31 // loop_header_branch
          %271 = sbr.rel (%p269) target = $region50
        $region47: #{bert_embedding_forward.1} parent=31 // loop_body
          %s273 = smul.u32 1, 1
          %s274 = sshll.u32 %s273, 4
          %275 = dma.done [#allocation3], %s274
        $region48: #{bert_embedding_forward.1} parent=31 // loop_footer
          %s272 = sadd.s32 1, %s268
        $region49: #{bert_embedding_forward.1} parent=31 // loop_footer_branch
          %267 = sbr.rel target = $region45
        $region50: #{bert_embedding_forward.1} parent=31 // loop_exit
          _
        %v276 = vld [vmem:[#allocation2] sm:$0xff]
        %v277 = vadd.f32 %v276, %v266
        %278 = vst [vmem:[%s203] sm:$0xff] %v277
        %s279 = sand.u32 %s124, 1
        %s280 = scalar_lea.sflag [#allocation7], %s279
        %s281 = sand.u32 %s124, 1
        %s282 = smul.addr %s281, 8
        %s283 = scalar_lea.vmem [#allocation6], %s282
        // Predicated region
        $region51: #{bert_embedding_forward.1} parent=31 // pred_check
          %p284 = pneg %p134
        $region52: #{bert_embedding_forward.1} parent=31 // pred_check_branch
          %286 = sbr.rel (%p284) target = $region54
        $region53: #{bert_embedding_forward.1} parent=31 // pred_region
          %s287 = sadd.s32 %s31, %s32
          %289 = vsyncadd %s280, 0
          %s290 = smul.addr %s287, 8
          %s291 = scalar_lea.hbm %s5, %s290
          %s293 = sshll.u32 %s283, 4
          %s294 = int_to_ptr.vmem [resolvable:$true] %s293
          %s295 = sshll.u32 %s291, 4
          %s296 = int_to_ptr.hbm [resolvable:$true] %s295
          %298 = dma.vmem_to_hbm [thread:$0]  %s294, 128, %s296, %s280
        $region54: #{bert_embedding_forward.1} parent=31 // pred_fallthru
          _
      $region32: #{bert_embedding_forward.1} parent=5 // pred_fallthru
        _
      %p299 = scmp.le.s32.totalorder 2, %s22
      // Predicated region
      $region55: #{bert_embedding_forward.1} parent=5 // pred_check
        %p300 = pneg %p299
      $region56: #{bert_embedding_forward.1} parent=5 // pred_check_branch
        %302 = sbr.rel (%p300) target = $region58
      $region57: #{bert_embedding_forward.1} parent=5 // pred_region
        %s303 = ssub.s32 %s22, 2
        // Predicated region
        $region59: #{bert_embedding_forward.1} parent=57 // pred_check
          %p304 = pneg %p140
        $region60: #{bert_embedding_forward.1} parent=57 // pred_check_branch
          %306 = sbr.rel (%p304) target = $region62
        $region61: #{bert_embedding_forward.1} parent=57 // pred_region
          %s307 = sand.u32 %s125, 1
          %s308 = scalar_lea.sflag [#allocation7], %s307
          %s309 = sand.u32 %s125, 1
          %s310 = smul.addr %s309, 8
          %s311 = scalar_lea.vmem [#allocation6], %s310
          %313 = dma.done %s308, 128
        $region62: #{bert_embedding_forward.1} parent=57 // pred_fallthru
          _
      $region58: #{bert_embedding_forward.1} parent=5 // pred_fallthru
        _
    $region6: #{bert_embedding_forward.1} parent=1 // loop_footer
      %s26 = sadd.s32 1, %s22
    $region7: #{bert_embedding_forward.1} parent=1 // loop_footer_branch
      %21 = sbr.rel target = $region3
    $region8: #{bert_embedding_forward.1} parent=1 // loop_exit
      _
    %314 = vsyncpa [#allocation7], 1
    %s315 = scalar_lea.sflag [#allocation7], 1
    %316 = vsyncpa %s315, 1
  %317 = vsyncmov [#allocation3]
  %s318 = vpop.sfrf %317
  %p319 = scmp.eq.s32.totalorder %s318, 0
  %p320 = pneg %p319
  %322 = shalt.err (%p320)

</llo_original>
